<compile_context>
chip_gen: v7x
topology: tpu7x:2x2x1
jax: 0.10.0
libtpu: 0.0.40
codegen_flags: <defaults>
</compile_context>

<pallas_src>
from typing import NamedTuple

import jax
import jax.numpy as jnp
from jax import lax
from jax.experimental import pallas as pl
from jax.experimental.pallas import tpu as pltpu


# ---------------------------------------------------------------------------
# Tiling constants (derived for the v7x 64 MiB VMEM budget; safe everywhere).
# ---------------------------------------------------------------------------
_TK_CAP = 2048                 # max contraction tile
_TN_CAP_NARROW = 2048          # max N tile when stream dtype <= 2 bytes (bf16)
_TN_CAP_WIDE = 1024            # max N tile when stream dtype is 4 bytes (f32)
_TM_CAP = 256                  # max batch tile
_VMEM_LIMIT_BYTES = 48 * 1024 * 1024
_PALLAS_MIN_WEIGHT_BYTES = 1 << 20   # below this, plain XLA wins (auto dispatch)


def _round_up(x: int, m: int) -> int:
    return (x + m - 1) // m * m


# ---------------------------------------------------------------------------
# Kernels
# ---------------------------------------------------------------------------
def _decoder_kernel_single_k(emb_ref, w_ref, out_ref):
    # emb_ref: (tm, D), w_ref: (tn, D) in native nn.Linear layout.
    # Single contraction tile: write the MXU result straight out (no scratch).
    lhs = emb_ref[...].astype(w_ref.dtype)
    out_ref[...] = lax.dot_general(
        lhs,
        w_ref[...],
        dimension_numbers=(((1,), (1,)), ((), ())),
        preferred_element_type=jnp.float32,
    ).astype(out_ref.dtype)


def _decoder_kernel_multi_k(emb_ref, w_ref, out_ref, acc_ref):
    # Split-K: f32 VMEM accumulator, K axis must stay last + "arbitrary".
    @pl.when(pl.program_id(2) == 0)
    def _():
        acc_ref[...] = jnp.zeros_like(acc_ref)

    lhs = emb_ref[...].astype(w_ref.dtype)
    acc_ref[...] += lax.dot_general(
        lhs,
        w_ref[...],
        dimension_numbers=(((1,), (1,)), ((), ())),
        preferred_element_type=jnp.float32,
    )

    @pl.when(pl.program_id(2) == pl.num_programs(2) - 1)
    def _():
        out_ref[...] = acc_ref[...].astype(out_ref.dtype)


# ---------------------------------------------------------------------------
# One-time weight preparation (pad + cast, hoisted out of the forward pass).
# ---------------------------------------------------------------------------
class PreparedDecoderWeight(NamedTuple):
    w: jax.Array          # (n_pad, d_pad), stream dtype, native (N, D) layout
    num_classes: int
    class_dim: int
    tn: int
    tk: int


def prepare_decoder_weight(weight: jax.Array,
                           *, stream_dtype=jnp.bfloat16) -> PreparedDecoderWeight:
    """Pad/cast the nn.Linear weight once.  weight: (num_classes, class_dim)."""
    N, D = weight.shape
    itemsize = jnp.dtype(stream_dtype).itemsize

    # --- contraction (K) tiling: full extent if it fits, else near-even 128x ---
    if D <= _TK_CAP:
        tk, d_pad = D, D
    else:
        k_tiles = pl.cdiv(D, _TK_CAP)
        tk = _round_up(pl.cdiv(D, k_tiles), 128)
        d_pad = tk * pl.cdiv(D, tk)

    # --- output (N) tiling: lane-dense, as large as the VMEM budget allows ---
    n128 = _round_up(N, 128)
    tn = min(_TN_CAP_NARROW if itemsize <= 2 else _TN_CAP_WIDE, n128)
    if n128 >= 256:
        # Keep >= 2 output tiles so both v7x TensorCores have work even when
        # there is a single batch tile (no-op for large num_classes).
        tn = min(tn, max(128, (n128 // 2) // 128 * 128))
    n_pad = _round_up(N, tn)

    w_p = weight.astype(stream_dtype)
    if (n_pad, d_pad) != (N, D):
        # Zero padding: K-padding contributes nothing; N-padding is sliced off.
        w_p = jnp.pad(w_p, ((0, n_pad - N), (0, d_pad - D)))
    return PreparedDecoderWeight(w=w_p, num_classes=N, class_dim=D, tn=tn, tk=tk)


# ---------------------------------------------------------------------------
# Forward pass
# ---------------------------------------------------------------------------
def decoder_forward(emb: jax.Array, prepared: PreparedDecoderWeight,
                    *, use_pallas=None) -> jax.Array:
    """emb: (B, class_dim) -> (B, num_classes); out = emb @ W.T."""
    B, D = emb.shape
    assert D == prepared.class_dim, "class_dim mismatch between emb and weight"
    N = prepared.num_classes
    w_p = prepared.w
    n_pad, d_pad = w_p.shape
    tn, tk = prepared.tn, prepared.tk
    out_dtype = emb.dtype

    if use_pallas is None:
        # Tiny decoders: pallas_call launch + DMA round-trip dominates.
        use_pallas = w_p.size * w_p.dtype.itemsize >= _PALLAS_MIN_WEIGHT_BYTES

    if not use_pallas:
        out = lax.dot_general(
            emb.astype(w_p.dtype), w_p[:N, :D],
            dimension_numbers=(((1,), (1,)), ((), ())),
            preferred_element_type=jnp.float32)
        return out.astype(out_dtype)

    # --- batch tiling: sublane-aligned; larger tm cuts weight re-streams ---
    if B <= _TM_CAP:
        tm = _round_up(B, 8)
        b_pad = tm
    else:
        tm = _TM_CAP
        b_pad = _round_up(B, tm)

    emb_p = emb
    if (b_pad, d_pad) != (B, D):
        # Per-call padding only touches the (small) activation, never the weight.
        emb_p = jnp.pad(emb, ((0, b_pad - B), (0, d_pad - D)))

    b_tiles = b_pad // tm
    n_tiles = n_pad // tn
    k_tiles = d_pad // tk

    w_bytes = w_p.size * w_p.dtype.itemsize
    emb_bytes = emb_p.size * emb_p.dtype.itemsize
    out_bytes = b_pad * n_pad * jnp.dtype(out_dtype).itemsize
    cost = pl.CostEstimate(
        flops=2 * b_pad * n_pad * d_pad,
        transcendentals=0,
        # Weight is re-streamed once per batch tile; emb is re-read per N tile
        # only in the split-K case (block index resets each j step).
        bytes_accessed=(w_bytes * b_tiles
                        + emb_bytes * (n_tiles if k_tiles > 1 else 1)
                        + out_bytes),
    )

    if k_tiles == 1:
        grid_spec = pltpu.PrefetchScalarGridSpec(
            num_scalar_prefetch=0,
            grid=(b_tiles, n_tiles),
            in_specs=[
                pl.BlockSpec((tm, tk), lambda i, j: (i, 0)),   # emb
                pl.BlockSpec((tn, tk), lambda i, j: (j, 0)),   # weight (N, D)
            ],
            out_specs=pl.BlockSpec((tm, tn), lambda i, j: (i, j)),
        )
        kernel = _decoder_kernel_single_k
        dim_sem = ("parallel", "parallel")
    else:
        grid_spec = pltpu.PrefetchScalarGridSpec(
            num_scalar_prefetch=0,
            grid=(b_tiles, n_tiles, k_tiles),
            in_specs=[
                pl.BlockSpec((tm, tk), lambda i, j, k: (i, k)),  # emb
                pl.BlockSpec((tn, tk), lambda i, j, k: (j, k)),  # weight (N, D)
            ],
            out_specs=pl.BlockSpec((tm, tn), lambda i, j, k: (i, j)),
            scratch_shapes=[pltpu.VMEM((tm, tn), jnp.float32)],
        )
        kernel = _decoder_kernel_multi_k
        dim_sem = ("parallel", "parallel", "arbitrary")  # K must stay last

    out_p = pl.pallas_call(
        kernel,
        out_shape=jax.ShapeDtypeStruct((b_pad, n_pad), out_dtype),
        grid_spec=grid_spec,
        compiler_params=pltpu.CompilerParams(
            dimension_semantics=dim_sem,
            vmem_limit_bytes=_VMEM_LIMIT_BYTES,
        ),
        cost_estimate=cost,
    )(emb_p, w_p)

    return out_p[:B, :N]


# ---------------------------------------------------------------------------
# Tests
# ---------------------------------------------------------------------------
if __name__ == "__main__":
    key = jax.random.PRNGKey(0)
    keys = jax.random.split(key, 6)

    # 1) Small shapes consistent with Decoder.forward (bf16 weight stream,
    #    forced Pallas path, single-K specialized kernel).
    B, class_dim, num_classes = 4, 32, 16
    emb = jax.random.normal(keys[0], (B, class_dim), dtype=jnp.float32)
    weight = 0.05 * jax.random.normal(
        keys[1], (num_classes, class_dim), dtype=jnp.float32)  # init_weights: N(0,0.05)
    prep = prepare_decoder_weight(weight)                      # bf16 stream (default)
    out = jax.block_until_ready(decoder_forward(emb, prep, use_pallas=True))
    ref = emb @ weight.T
    assert out.shape == (B, num_classes)
    assert jnp.allclose(out, ref, atol=2e-2, rtol=2e-2)

    # 2) f32 weight stream, multi-N-tile path (tight tolerance vs f32 ref).
    B2, D2, N2 = 16, 256, 1000
    emb2 = jax.random.normal(keys[2], (B2, D2), dtype=jnp.float32)
    w2 = 0.05 * jax.random.normal(keys[3], (N2, D2), dtype=jnp.float32)
    prep2 = prepare_decoder_weight(w2, stream_dtype=jnp.float32)
    out2 = jax.block_until_ready(decoder_forward(emb2, prep2, use_pallas=True))
    ref2 = emb2 @ w2.T
    assert out2.shape == (B2, N2)
    assert jnp.allclose(out2, ref2, atol=1e-4, rtol=1e-4)

    # 3) Split-K path (class_dim > 2048), bf16 stream with f32 accumulator.
    B3, D3, N3 = 8, 2560, 1024
    emb3 = jax.random.normal(keys[4], (B3, D3), dtype=jnp.float32)
    w3 = 0.05 * jax.random.normal(keys[5], (N3, D3), dtype=jnp.float32)
    prep3 = prepare_decoder_weight(w3)
    out3 = jax.block_until_ready(decoder_forward(emb3, prep3, use_pallas=True))
    ref3 = emb3 @ w3.T
    assert out3.shape == (B3, N3)
    assert jnp.allclose(out3, ref3, atol=1e-1, rtol=5e-2)

    print("KERNEL_OK")
</pallas_src>

<mosaic_0001>
module attributes {stable_mosaic.version = 11 : i64} {
  func.func @_decoder_kernel_single_k(%arg0: i32, %arg1: i32, %arg2: memref<8x32xf32, #tpu.memory_space<vmem>>, %arg3: memref<128x32xbf16, #tpu.memory_space<vmem>>, %arg4: memref<8x128xf32, #tpu.memory_space<vmem>>) attributes {dimension_semantics = [#tpu.dimension_semantics<parallel>, #tpu.dimension_semantics<parallel>], iteration_bounds = array<i64: 1, 1>, scalar_prefetch = 0 : i64, scratch_operands = 0 : i64, tpu.core_type = #tpu.core_type<tc>, window_params = [{transform_indices = @transform_0, window_bounds = array<i64: 8, 32>}, {transform_indices = @transform_1, window_bounds = array<i64: 128, 32>}, {transform_indices = @transform_2, window_bounds = array<i64: 8, 128>}]} {
    %c0 = arith.constant 0 : index
    %c0_0 = arith.constant 0 : index
    %0 = vector.load %arg2[%c0, %c0_0] : memref<8x32xf32, #tpu.memory_space<vmem>>, vector<8x32xf32>
    %1 = arith.truncf %0 : vector<8x32xf32> to vector<8x32xbf16>
    %c0_1 = arith.constant 0 : index
    %c0_2 = arith.constant 0 : index
    %2 = vector.load %arg3[%c0_1, %c0_2] : memref<128x32xbf16, #tpu.memory_space<vmem>>, vector<128x32xbf16>
    %cst = arith.constant dense<0.000000e+00> : vector<8x128xf32>
    %3 = tpu.matmul %1, %2, %cst {dimension_numbers = #tpu.dot_dimension_numbers<[1], [1], [0], [0], [0, 0, 1, 0], [], []>} : vector<8x32xbf16>, vector<128x32xbf16>, vector<8x128xf32> -> vector<8x128xf32>
    %c0_3 = arith.constant 0 : index
    %c0_4 = arith.constant 0 : index
    %4 = vector.load %arg4[%c0_3, %c0_4] : memref<8x128xf32, #tpu.memory_space<vmem>>, vector<8x128xf32>
    tpu.vector_store %arg4[%c0_3, %c0_4], %3 {strides = array<i32>} : memref<8x128xf32, #tpu.memory_space<vmem>>, vector<8x128xf32>,
    return
  }
  func.func @transform_0(%arg0: i32, %arg1: i32) -> (i32, i32) {
    %c0_i32 = arith.constant 0 : i32
    %c0_i32_0 = arith.constant 0 : i32
    return %arg0, %c0_i32 : i32, i32
  }
  func.func @transform_1(%arg0: i32, %arg1: i32) -> (i32, i32) {
    %c0_i32 = arith.constant 0 : i32
    %c0_i32_0 = arith.constant 0 : i32
    return %arg1, %c0_i32 : i32, i32
  }
  func.func @transform_2(%arg0: i32, %arg1: i32) -> (i32, i32) {
    %c0_i32 = arith.constant 0 : i32
    return %arg0, %arg1 : i32, i32
  }
}

</mosaic_0001>

<llo_original>
// kernel: tpu_custom_call.1
$region0: #{tpu_custom_call.1}
  #allocation0 [shape = 'u32[]', space=smem, size = 0x4, offset = 0x4, fixed_abs, tag = 'smem constant byte address 0x4 - core index']
  #allocation1 [shape = 'u32[144,128]{1,0:T(1,128)}', space=vmem, size = 0x12000, scoped, tag = 'internal scratch']
  %s0 = inlined_call_operand.vmem [shape: f32[8,32], index: 0, kind: input, shape index: {}]
  %s1 = inlined_call_operand.vmem [shape: bf16[128,32], index: 1, kind: input, shape index: {}]
  %s2 = inlined_call_operand.hbm [shape: f32[8,128], index: 2, kind: output, shape index: {}]
  %s3 = sld [smem:[#allocation0]]
  $region18: #{tpu_custom_call.1} parent=0
    _
  %s5 = ssub.s32 1, %s3
  %s6 = scalar_select 0, %s5, %s3
  $region1: #{tpu_custom_call.1} parent=0
    #allocation2 [shape = 'u8[4096]{0}', space=vmem, size = 0x1000, scoped, tag = 'output window, operand 0, single buffered']
    #allocation3 [shape = 's32[1]{0}', space=sflag, size = 0x4, scoped, tag = 'scoped memory for tpu_custom_call.1']
    %7 = vsyncpa [#allocation3], 0
    // Predicated region
    $region2: #{tpu_custom_call.1} parent=1 // pred_check
      _
    $region3: #{tpu_custom_call.1} parent=1 // pred_check_branch
      %9 = sbr.rel (0) target = $region5
    $region4: #{tpu_custom_call.1} parent=1 // pred_region
      _
    $region5: #{tpu_custom_call.1} parent=1 // pred_fallthru
      _
    // Predicated region
    $region6: #{tpu_custom_call.1} parent=1 // pred_check
      _
    $region7: #{tpu_custom_call.1} parent=1 // pred_check_branch
      %11 = sbr.rel (0) target = $region9
    $region8: #{tpu_custom_call.1} parent=1 // pred_region
      _
    $region9: #{tpu_custom_call.1} parent=1 // pred_fallthru
      _
    %v13 = vld [vmem:[%s0] sm:$0xff]
    %v14 = vpack.c.bf16 %v13, %v13
    %v15 = vld [vmem:[%s1] sm:$0xf]
    %v16 = vld [vmem:[%s1 + $0x4] sm:$0xf]
    %v17 = vld [vmem:[%s1 + $0x8] sm:$0xf]
    %v18 = vld [vmem:[%s1 + $0xc] sm:$0xf]
    %v19 = vld [vmem:[%s1 + $0x10] sm:$0xf]
    %v20 = vld [vmem:[%s1 + $0x14] sm:$0xf]
    %v21 = vld [vmem:[%s1 + $0x18] sm:$0xf]
    %v22 = vld [vmem:[%s1 + $0x1c] sm:$0xf]
    %v23 = vld [vmem:[%s1 + $0x20] sm:$0xf]
    %v24 = vld [vmem:[%s1 + $0x24] sm:$0xf]
    %v25 = vld [vmem:[%s1 + $0x28] sm:$0xf]
    %v26 = vld [vmem:[%s1 + $0x2c] sm:$0xf]
    %v27 = vld [vmem:[%s1 + $0x30] sm:$0xf]
    %v28 = vld [vmem:[%s1 + $0x34] sm:$0xf]
    %v29 = vld [vmem:[%s1 + $0x38] sm:$0xf]
    %v30 = vld [vmem:[%s1 + $0x3c] sm:$0xf]
    %v47 = vunpack.c.l.b16 %v15
    %v48 = vunpack.c.l.b16 %v16
    %v49 = vunpack.c.l.b16 %v17
    %v50 = vunpack.c.l.b16 %v18
    %v51 = vunpack.c.l.b16 %v19
    %v52 = vunpack.c.l.b16 %v20
    %v53 = vunpack.c.l.b16 %v21
    %v54 = vunpack.c.l.b16 %v22
    %v55 = vunpack.c.l.b16 %v23
    %v56 = vunpack.c.l.b16 %v24
    %v57 = vunpack.c.l.b16 %v25
    %v58 = vunpack.c.l.b16 %v26
    %v59 = vunpack.c.l.b16 %v27
    %v60 = vunpack.c.l.b16 %v28
    %v61 = vunpack.c.l.b16 %v29
    %v62 = vunpack.c.l.b16 %v30
    %v63 = vpack.c.b16 %v48, %v47
    %v64 = vpack.c.b16 %v50, %v49
    %v65 = vpack.c.b16 %v52, %v51
    %v66 = vpack.c.b16 %v54, %v53
    %v67 = vpack.c.b16 %v56, %v55
    %v68 = vpack.c.b16 %v58, %v57
    %v69 = vpack.c.b16 %v60, %v59
    %v70 = vpack.c.b16 %v62, %v61
    %vm71 = vcmask 261120
    %v73 = vsel %vm71, %v14, 0
    %v76 = vsel %vm71, %v63, 0
    %v79 = vsel %vm71, %v64, 0
    %v82 = vsel %vm71, %v65, 0
    %v85 = vsel %vm71, %v66, 0
    %v88 = vsel %vm71, %v67, 0
    %v91 = vsel %vm71, %v68, 0
    %v94 = vsel %vm71, %v69, 0
    %v97 = vsel %vm71, %v70, 0
    %99 = vmatprep.subr.bf16.mxu0 0
    %100 = vmatpush1.bf16.xpose.msra.mxu0 %v76
    %101 = vmatprep.subr.bf16.mxu0 0
    %102 = vmatpush1.bf16.xpose.msra.mxu0 %v79
    %103 = vmatprep.subr.bf16.mxu0 0
    %104 = vmatpush1.bf16.xpose.msra.mxu0 %v82
    %105 = vmatprep.subr.bf16.mxu0 0
    %106 = vmatpush1.bf16.xpose.msra.mxu0 %v85
    %107 = vmatprep.subr.bf16.mxu0 0
    %108 = vmatpush1.bf16.xpose.msra.mxu0 %v88
    %109 = vmatprep.subr.bf16.mxu0 0
    %110 = vmatpush1.bf16.xpose.msra.mxu0 %v91
    %111 = vmatprep.subr.bf16.mxu0 0
    %112 = vmatpush1.bf16.xpose.msra.mxu0 %v94
    %113 = vmatprep.subr.bf16.mxu0 0
    %114 = vmatpush1.bf16.xpose.msra.mxu0 %v97
    %115 = vmatprep.subr.bf16.mxu0 0
    %116 = vmatpush1.bf16.xpose.msra.mxu0 0
    %117 = vmatprep.subr.bf16.mxu0 0
    %118 = vmatpush1.bf16.xpose.msra.mxu0 0
    %119 = vmatprep.subr.bf16.mxu0 0
    %120 = vmatpush1.bf16.xpose.msra.mxu0 0
    %121 = vmatprep.subr.bf16.mxu0 0
    %122 = vmatpush1.bf16.xpose.msra.mxu0 0
    %123 = vmatprep.subr.bf16.mxu0 0
    %124 = vmatpush1.bf16.xpose.msra.mxu0 0
    %125 = vmatprep.subr.bf16.mxu0 0
    %126 = vmatpush1.bf16.xpose.msra.mxu0 0
    %127 = vmatprep.subr.bf16.mxu0 0
    %128 = vmatpush1.bf16.xpose.msra.mxu0 0
    %129 = vmatprep.subr.bf16.mxu0 0
    %130 = vmatpush1.bf16.xpose.msra.mxu0 0
    %131 = vmatprep.mubr.bf16.mxu0 0
    %132 = vmatmul.mubr.bf16.gmra.mrb[0].mxu0 %v73
    %v133 = vpop.f32.mrb[0].mxu0
    %v134 = vadd.f32 0.0, %v133
    %v135 = vpop.f32.mrb[0].mxu0
    %v136 = vpop.f32.mrb[0].mxu0
    %v137 = vpop.f32.mrb[0].mxu0
    %138 = vdwg.mxu0
    %139 = vst [vmem:[#allocation2] sm:$0xff] %v134
    // Predicated region
    $region10: #{tpu_custom_call.1} parent=1 // pred_check
      _
    $region11: #{tpu_custom_call.1} parent=1 // pred_check_branch
      %141 = sbr.rel (0) target = $region13
    $region12: #{tpu_custom_call.1} parent=1 // pred_region
      %s143 = ssub.s32 128, 128
      %144 = vsyncadd [#allocation3], %s143
      %s146 = sshll.u32 [#allocation2], 4
      %s147 = int_to_ptr.vmem [resolvable:$true] %s146
      %149 = dma.vmem_to_hbm [thread:$0]  %s147, 128, %s2, [#allocation3]
    $region13: #{tpu_custom_call.1} parent=1 // pred_fallthru
      _
    // Predicated region
    $region14: #{tpu_custom_call.1} parent=1 // pred_check
      _
    $region15: #{tpu_custom_call.1} parent=1 // pred_check_branch
      %151 = sbr.rel (0) target = $region17
    $region16: #{tpu_custom_call.1} parent=1 // pred_region
      %152 = dma.done [#allocation3], 128
    $region17: #{tpu_custom_call.1} parent=1 // pred_fallthru
      _
    %153 = vsyncpa [#allocation3], 1

</llo_original>
